<compile_context>
chip_gen: v7x
topology: tpu7x:2x2x1
jax: 0.10.0
libtpu: 0.0.40
codegen_flags: <defaults>
</compile_context>

<pallas_src>
import math

import jax
import jax.numpy as jnp
from jax.experimental import pallas as pl
from jax.experimental.pallas import tpu as pltpu


_LANE = 128
_SUBLANE = 8


def _device_tuning():
    """Per-chip copy-block size (bytes) and whether the chip has 2 TensorCores."""
    try:
        kind = jax.devices()[0].device_kind.lower()
    except Exception:
        kind = ""
    if "v7" in kind:
        # 6 MiB blocks -> 24 MiB live with in+out double-buffering (< 32 MiB
        # scoped default, < 64 MiB physical VMEM); 2 TCs per chip.
        return 6 * 1024 * 1024, True
    if "v6" in kind:
        # 4 MiB blocks -> 16 MiB live (< 32 MiB scoped default).
        return 4 * 1024 * 1024, False
    # v5e and unknown: 2 MiB blocks -> 8 MiB live (< 16 MiB scoped default).
    return 2 * 1024 * 1024, False


# ---------------------------------------------------------------------------
# Path 1: zero-traffic aliased identity (no DMA at all).
# ---------------------------------------------------------------------------
def _noop_kernel(x_ref, o_ref):
    # Output HBM buffer is aliased to the input buffer; nothing to move.
    del x_ref, o_ref


def _identity_alias_noop(x):
    return pl.pallas_call(
        _noop_kernel,
        out_shape=jax.ShapeDtypeStruct(x.shape, x.dtype),
        in_specs=[pl.BlockSpec(memory_space=pl.ANY)],
        out_specs=pl.BlockSpec(memory_space=pl.ANY),
        input_output_aliases={0: 0},
        compiler_params=pltpu.CompilerParams(has_side_effects=True),
        cost_estimate=pl.CostEstimate(flops=0, transcendentals=0,
                                      bytes_accessed=0),
    )(x)


# ---------------------------------------------------------------------------
# Path 2: streaming copy (explicit materialization).
# ---------------------------------------------------------------------------
def _copy_kernel(x_ref, o_ref):
    o_ref[...] = x_ref[...]


def _identity_copy_2d(x2d, tile_rows, tile_cols):
    rows, cols = x2d.shape
    itemsize = jnp.dtype(x2d.dtype).itemsize
    return pl.pallas_call(
        _copy_kernel,
        out_shape=jax.ShapeDtypeStruct((rows, cols), x2d.dtype),
        grid=(pl.cdiv(rows, tile_rows), pl.cdiv(cols, tile_cols)),
        in_specs=[pl.BlockSpec((tile_rows, tile_cols), lambda i, j: (i, j))],
        out_specs=pl.BlockSpec((tile_rows, tile_cols), lambda i, j: (i, j)),
        input_output_aliases={0: 0},
        compiler_params=pltpu.CompilerParams(
            dimension_semantics=("parallel", "parallel"),
        ),
        cost_estimate=pl.CostEstimate(
            flops=0, transcendentals=0,
            bytes_accessed=2 * rows * cols * itemsize),
    )(x2d)


def _choose_layout(total, itemsize, block_bytes, multi_tc):
    """Pick (rows, cols, tile_rows, tile_cols) for the flattened copy."""
    if total % _LANE == 0:
        # Lane-dense layout; prefer wide lanes but keep >= 8 sublane rows so
        # each (8 x 128) vreg is fully used.
        cols = _LANE
        for cand in (1024, 512, 256):
            if total % cand == 0 and total // cand >= _SUBLANE:
                cols = cand
                break
        rows = total // cols
        row_bytes = cols * itemsize
        budget_rows = max(_SUBLANE,
                          (block_bytes // row_bytes) // _SUBLANE * _SUBLANE)
        tile_rows = rows if rows <= budget_rows else budget_rows
        # On 2-TensorCore chips give mid-size tensors >= 2 parallel grid steps
        # so both cores' DMA/HBM paths are used.
        if (multi_tc and tile_rows == rows and rows > _SUBLANE
                and rows * row_bytes >= (1 << 20)):
            tile_rows = max(_SUBLANE, (rows // 2) // _SUBLANE * _SUBLANE)
        return rows, cols, tile_rows, cols
    # Non-128-divisible total: a single (1, N) strip tiled along the lane axis
    # in multiples of 128; only the final vreg tail is masked.
    cols = total
    budget_cols = max(_LANE, (block_bytes // itemsize) // _LANE * _LANE)
    tile_cols = cols if cols <= budget_cols else budget_cols
    return 1, cols, 1, tile_cols


def _identity_copy(x):
    shape = x.shape
    total = math.prod(shape) if shape else 1
    if total == 0:
        return x  # nothing to copy
    itemsize = jnp.dtype(x.dtype).itemsize
    block_bytes, multi_tc = _device_tuning()
    rows, cols, tile_rows, tile_cols = _choose_layout(
        total, itemsize, block_bytes, multi_tc)
    out2d = _identity_copy_2d(x.reshape(rows, cols), tile_rows, tile_cols)
    return out2d.reshape(shape)


class TargetPallas:
    """JAX/Pallas equivalent of the PyTorch `target` module (identity)."""

    def __init__(self, feat_type="feature", zero_copy=True):
        if feat_type not in ("feature", "attention"):
            raise ValueError("Select Proper Feat Type")
        self.feat_type = feat_type
        # zero_copy=True -> aliased no-op (zero HBM traffic; truly free when
        # the caller donates x via jax.jit(..., donate_argnums=...)).
        # zero_copy=False -> explicit streaming copy.
        self.zero_copy = zero_copy

    def __call__(self, x):
        if self.zero_copy:
            return _identity_alias_noop(x)
        return _identity_copy(x)


if __name__ == "__main__":
    key = jax.random.PRNGKey(0)
    # Small NCHW input consistent with a ResNet feature map.
    x = jax.random.normal(key, (2, 4, 16, 16), dtype=jnp.float32)

    # Default zero-traffic path, both feat types.
    mod = TargetPallas(feat_type="feature")
    y = jax.block_until_ready(mod(x))
    assert y.shape == x.shape and y.dtype == x.dtype
    assert bool(jnp.array_equal(y, x))

    mod_attn = TargetPallas(feat_type="attention")
    y2 = jax.block_until_ready(mod_attn(x))
    assert bool(jnp.array_equal(y2, x))

    # Streaming-copy fallback: f32, bf16 (native narrow-dtype copy, no packing),
    # and a non-128-divisible total (7x7 feature map -> (1, N) strip layout).
    mod_copy = TargetPallas(feat_type="feature", zero_copy=False)

    yc = jax.block_until_ready(mod_copy(x))
    assert yc.shape == x.shape and yc.dtype == x.dtype
    assert bool(jnp.array_equal(yc, x))

    xb = x.astype(jnp.bfloat16)
    yb = jax.block_until_ready(mod_copy(xb))
    assert yb.dtype == xb.dtype and bool(jnp.array_equal(yb, xb))

    x7 = jax.random.normal(key, (2, 3, 7, 7), dtype=jnp.float32)
    y7 = jax.block_until_ready(mod_copy(x7))
    assert bool(jnp.array_equal(y7, x7))
    y7n = jax.block_until_ready(mod(x7))
    assert bool(jnp.array_equal(y7n, x7))

    print("KERNEL_OK")
</pallas_src>

<mosaic_0001>
module attributes {stable_mosaic.version = 11 : i64} {
  func.func @_noop_kernel(%arg0: memref<2x4x16x16xf32, #tpu.memory_space<any>>, %arg1: memref<2x4x16x16xf32, #tpu.memory_space<any>>) attributes {dimension_semantics = [], scalar_prefetch = 0 : i64, scratch_operands = 0 : i64, tpu.core_type = #tpu.core_type<tc>} {
    return
  }
}

</mosaic_0001>

<llo_original>
// kernel: tpu_custom_call.1
$region0: #{tpu_custom_call.1}
  #allocation0 [shape = 'u32[]', space=smem, size = 0x4, offset = 0x4, fixed_abs, tag = 'smem constant byte address 0x4 - core index']
  #allocation1 [shape = 'u32[144,128]{1,0:T(1,128)}', space=vmem, size = 0x12000, scoped, tag = 'internal scratch']
  %s0 = inlined_call_operand.hbm [shape: f32[2,4,16,16], index: 0, kind: input, shape index: {}, may-alias: {0,1}]
  %s1 = inlined_call_operand.hbm [shape: f32[2,4,16,16], index: 1, kind: output, shape index: {}, may-alias: {0,1}]
  %s2 = sld [smem:[#allocation0]]
  $region2: #{tpu_custom_call.1} parent=0
    _
  %s4 = ssub.s32 1, %s2
  %s5 = scalar_select 0, %s4, %s2

</llo_original>
